<compile_context>
chip_gen: v5e
topology: v5e:2x2
jax: 0.10.0
libtpu: 0.0.40
codegen_flags: <defaults>
</compile_context>

<pallas_src>
import jax
import jax.numpy as jnp
from jax.experimental import pallas as pl
from jax.experimental.pallas import tpu as pltpu

_LANES = 128


def _round_up(x, m):
    return ((x + m - 1) // m) * m


def _contrastive_loss_kernel(pre_ref, gt_ref, partial_ref):
    pre = pre_ref[...].astype(jnp.float32)
    gt = gt_ref[...].astype(jnp.float32)  # mirrors gt_relation.float()

    # NOTE: the reference forward hardcodes the literal 2.0 (self.margin ignored),
    # so we intentionally do the same.
    hinge = jnp.maximum(2.0 - pre, 0.0)
    combined = gt * pre * pre + hinge * hinge * (1.0 - gt)

    # One fused reduction per tile; partial sum goes to this step's own SMEM slot.
    partial_ref[0, 0] = jnp.sum(combined)


def contrastive_loss(pre_relation, gt_relation, *, tile_rows=4096):
    """ContrastiveLoss forward (mmcls) via a Pallas TPU kernel.

    pre_relation: float array (any shape)
    gt_relation:  {0,1} labels, same shape
    Returns a float32 scalar.
    """
    assert pre_relation.shape == gt_relation.shape
    n_elems = int(pre_relation.size)

    # Lane-dense layout: flatten, pad to full tiles, reshape to (rows, 128).
    # Padding values (pre=0, gt=1) make both terms vanish:
    #   gt*pre^2 = 1*0 = 0 ; clamp(2-0)^2 * (1-1) = 0.
    rows = -(-n_elems // _LANES)
    tile_rows_eff = max(16, min(tile_rows, _round_up(rows, 16)))
    tile_rows_eff = _round_up(tile_rows_eff, 16)  # bf16 gt needs sublane pairs
    rows_padded = _round_up(rows, tile_rows_eff)
    num_tiles = rows_padded // tile_rows_eff
    pad = rows_padded * _LANES - n_elems

    pre_flat = jnp.ravel(pre_relation)                     # keep caller's dtype
    gt_flat = jnp.ravel(gt_relation).astype(jnp.bfloat16)  # {0,1} mask -> half the bytes
    pre2d = jnp.pad(pre_flat, (0, pad)).reshape(rows_padded, _LANES)
    gt2d = jnp.pad(gt_flat, (0, pad), constant_values=1).reshape(rows_padded, _LANES)

    # VMEM budget: 2 pipeline buffers per input + headroom, clamped to stay safe
    # on v5e (16 MiB scoped default) and v7x (64 MiB physical VMEM).
    block_bytes = tile_rows_eff * _LANES * (pre2d.dtype.itemsize + gt2d.dtype.itemsize)
    vmem_limit = max(16 * 1024 * 1024,
                     min(2 * block_bytes + (2 << 20), 48 * 1024 * 1024))

    partials = pl.pallas_call(
        _contrastive_loss_kernel,
        out_shape=jax.ShapeDtypeStruct((num_tiles, 1), jnp.float32),
        grid_spec=pltpu.PrefetchScalarGridSpec(
            num_scalar_prefetch=0,
            grid=(num_tiles,),
            in_specs=[
                pl.BlockSpec((tile_rows_eff, _LANES), lambda i: (i, 0)),
                pl.BlockSpec((tile_rows_eff, _LANES), lambda i: (i, 0)),
            ],
            out_specs=pl.BlockSpec(
                (1, 1), lambda i: (i, 0),
                memory_space=pltpu.MemorySpace.SMEM,
            ),
        ),
        compiler_params=pltpu.CompilerParams(
            # Independent per-tile partials -> row axis is truly parallel
            # (lets v7x shard the stream across both TensorCores).
            dimension_semantics=("parallel",),
            vmem_limit_bytes=vmem_limit,
        ),
    )(pre2d, gt2d)

    # Mean over the ORIGINAL element count; tiny final reduction left to XLA.
    return (0.5 * jnp.sum(partials) / n_elems).astype(jnp.float32)


def contrastive_loss_ref(pre_relation, gt_relation):
    pre = pre_relation.astype(jnp.float32)
    gt = gt_relation.astype(jnp.float32)
    return (0.5 * jnp.mean(gt * pre * pre)
            + 0.5 * jnp.mean(jnp.maximum(2.0 - pre, 0.0) ** 2 * (1.0 - gt)))


if __name__ == "__main__":
    key = jax.random.PRNGKey(0)
    k_pre, k_gt, k_pre2, k_gt2 = jax.random.split(key, 4)

    # Small, lane-aligned case.
    rows, cols = 16, 128
    pre_relation = jax.random.normal(k_pre, (rows, cols), dtype=jnp.float32) + 1.0
    gt_relation = jax.random.bernoulli(k_gt, 0.5, (rows, cols)).astype(jnp.int32)

    loss = contrastive_loss(pre_relation, gt_relation)
    loss = jax.block_until_ready(loss)
    ref = contrastive_loss_ref(pre_relation, gt_relation)
    assert jnp.allclose(loss, ref, rtol=1e-5, atol=1e-5), (loss, ref)

    # Ragged case (exercises the flatten + pad path).
    pre_r = jax.random.normal(k_pre2, (7, 37), dtype=jnp.float32) + 1.0
    gt_r = jax.random.bernoulli(k_gt2, 0.5, (7, 37)).astype(jnp.int32)

    loss_r = contrastive_loss(pre_r, gt_r)
    loss_r = jax.block_until_ready(loss_r)
    ref_r = contrastive_loss_ref(pre_r, gt_r)
    assert jnp.allclose(loss_r, ref_r, rtol=1e-5, atol=1e-5), (loss_r, ref_r)

    print("KERNEL_OK")
</pallas_src>

<mosaic_0001>
module attributes {stable_mosaic.version = 11 : i64} {
  func.func @_contrastive_loss_kernel(%arg0: i32, %arg1: memref<16x128xf32, #tpu.memory_space<vmem>>, %arg2: memref<16x128xbf16, #tpu.memory_space<vmem>>, %arg3: memref<1x1xf32, #tpu.memory_space<smem>>) attributes {dimension_semantics = [#tpu.dimension_semantics<parallel>], iteration_bounds = array<i64: 1>, scalar_prefetch = 0 : i64, scratch_operands = 0 : i64, tpu.core_type = #tpu.core_type<tc>, window_params = [{transform_indices = @transform_0, window_bounds = array<i64: 16, 128>}, {transform_indices = @transform_1, window_bounds = array<i64: 16, 128>}, {transform_indices = @transform_2, window_bounds = array<i64: 1, 1>}]} {
    %c0 = arith.constant 0 : index
    %c0_0 = arith.constant 0 : index
    %0 = vector.load %arg1[%c0, %c0_0] : memref<16x128xf32, #tpu.memory_space<vmem>>, vector<16x128xf32>
    %c0_1 = arith.constant 0 : index
    %c0_2 = arith.constant 0 : index
    %1 = vector.load %arg2[%c0_1, %c0_2] : memref<16x128xbf16, #tpu.memory_space<vmem>>, vector<16x128xbf16>
    %2 = arith.extf %1 : vector<16x128xbf16> to vector<16x128xf32>
    %cst = arith.constant 2.000000e+00 : f32
    %3 = vector.broadcast %cst : f32 to vector<16x128xf32>
    %4 = arith.subf %3, %0 : vector<16x128xf32>
    %cst_3 = arith.constant 0.000000e+00 : f32
    %5 = vector.broadcast %cst_3 : f32 to vector<16x128xf32>
    %6 = arith.maximumf %4, %5 : vector<16x128xf32>
    %7 = arith.mulf %2, %0 : vector<16x128xf32>
    %8 = arith.mulf %7, %0 : vector<16x128xf32>
    %9 = arith.mulf %6, %6 : vector<16x128xf32>
    %cst_4 = arith.constant 1.000000e+00 : f32
    %10 = vector.broadcast %cst_4 : f32 to vector<16x128xf32>
    %11 = arith.subf %10, %2 : vector<16x128xf32>
    %12 = arith.mulf %9, %11 : vector<16x128xf32>
    %13 = arith.addf %8, %12 : vector<16x128xf32>
    %14 = vector.shape_cast %13 : vector<16x128xf32> to vector<1x16x128xf32>
    %cst_5 = arith.constant dense<0.000000e+00> : vector<1xf32>
    %15 = vector.multi_reduction <add>, %14, %cst_5 [1, 2] : vector<1x16x128xf32> to vector<1xf32>
    %16 = vector.shape_cast %15 : vector<1xf32> to vector<1x1x1xf32>
    %17 = vector.extract %16[0, 0, 0] : f32 from vector<1x1x1xf32>
    %c0_6 = arith.constant 0 : index
    %c0_7 = arith.constant 0 : index
    %18 = memref.load %arg3[%c0_6, %c0_7] : memref<1x1xf32, #tpu.memory_space<smem>>
    memref.store %17, %arg3[%c0_6, %c0_7] : memref<1x1xf32, #tpu.memory_space<smem>>
    return
  }
  func.func @transform_0(%arg0: i32) -> (i32, i32) {
    %c0_i32 = arith.constant 0 : i32
    %c0_i32_0 = arith.constant 0 : i32
    return %arg0, %c0_i32 : i32, i32
  }
  func.func @transform_1(%arg0: i32) -> (i32, i32) {
    %c0_i32 = arith.constant 0 : i32
    %c0_i32_0 = arith.constant 0 : i32
    return %arg0, %c0_i32 : i32, i32
  }
  func.func @transform_2(%arg0: i32) -> (i32, i32) {
    %c0_i32 = arith.constant 0 : i32
    %c0_i32_0 = arith.constant 0 : i32
    return %arg0, %c0_i32 : i32, i32
  }
}

</mosaic_0001>

<llo_original>
// kernel: tpu_custom_call.1
$region0: #{tpu_custom_call.1}
  #allocation0 [shape = 'u32[]', space=smem, size = 0x4, offset = 0x4, fixed_abs, tag = 'smem constant byte address 0x4 - core index']
  #allocation1 [shape = 'u32[72,128]{1,0:T(1,128)}', space=vmem, size = 0x9000, scoped, tag = 'internal scratch']
  %s0 = inlined_call_operand.hbm [shape: f32[16,128], index: 0, kind: input, shape index: {}]
  %s1 = inlined_call_operand.hbm [shape: bf16[16,128], index: 1, kind: input, shape index: {}]
  %s2 = inlined_call_operand.hbm [shape: f32[1,1], index: 2, kind: output, shape index: {}]
  %s3 = sld [smem:[#allocation0]]
  $region26: #{tpu_custom_call.1} parent=0
    _
  %s5 = ssub.s32 1, %s3
  %s6 = scalar_select 0, %s5, %s3
  $region1: #{tpu_custom_call.1} parent=0
    #allocation2 [shape = 'u8[8192]{0}', space=vmem, size = 0x2000, scoped, tag = 'input window, operand 0, single buffered']
    #allocation3 [shape = 's32[1]{0}', space=sflag, size = 0x4, scoped, tag = 'scoped memory for tpu_custom_call.1']
    #allocation4 [shape = 's32[1]{0}', space=sflag, size = 0x4, scoped, tag = 'scoped memory for tpu_custom_call.1']
    #allocation5 [shape = 'u8[4096]{0}', space=vmem, size = 0x1000, scoped, tag = 'input window, operand 1, single buffered']
    #allocation6 [shape = 's32[1]{0}', space=sflag, size = 0x4, scoped, tag = 'scoped memory for tpu_custom_call.1']
    #allocation7 [shape = 'u8[512]{0}', space=smem, size = 0x200, scoped, tag = 'output window, operand 0, single buffered']
    %7 = vsyncpa [#allocation3], 0
    %8 = vsyncpa [#allocation6], 0
    %9 = vsyncpa [#allocation4], 0
    // Predicated region
    $region2: #{tpu_custom_call.1} parent=1 // pred_check
      _
    $region3: #{tpu_custom_call.1} parent=1 // pred_check_branch
      %11 = sbr.rel (0) target = $region5
    $region4: #{tpu_custom_call.1} parent=1 // pred_region
      %13 = vsyncadd [#allocation3], 0
      %s14 = sshll.u32 %s0, 4
      %s15 = int_to_ptr.hbm [resolvable:$true] %s14
      %s16 = sshll.u32 [#allocation2], 4
      %s17 = int_to_ptr.vmem [resolvable:$true] %s16
      %22 = dma.hbm_to_vmem [thread:$0]  %s15, 256, %s17, [#allocation3], 128, 128, 8
    $region5: #{tpu_custom_call.1} parent=1 // pred_fallthru
      _
    // Predicated region
    $region6: #{tpu_custom_call.1} parent=1 // pred_check
      _
    $region7: #{tpu_custom_call.1} parent=1 // pred_check_branch
      %24 = sbr.rel (0) target = $region9
    $region8: #{tpu_custom_call.1} parent=1 // pred_region
      %26 = vsyncadd [#allocation6], 0
      %s27 = sshll.u32 %s1, 4
      %s28 = int_to_ptr.hbm [resolvable:$true] %s27
      %s29 = sshll.u32 [#allocation5], 4
      %s30 = int_to_ptr.vmem [resolvable:$true] %s29
      %35 = dma.hbm_to_vmem [thread:$0]  %s28, 128, %s30, [#allocation6], 64, 64, 4
    $region9: #{tpu_custom_call.1} parent=1 // pred_fallthru
      _
    // Predicated region
    $region10: #{tpu_custom_call.1} parent=1 // pred_check
      _
    $region11: #{tpu_custom_call.1} parent=1 // pred_check_branch
      %37 = sbr.rel (0) target = $region13
    $region12: #{tpu_custom_call.1} parent=1 // pred_region
      %39 = dma.done [#allocation3], 256
    $region13: #{tpu_custom_call.1} parent=1 // pred_fallthru
      _
    // Predicated region
    $region14: #{tpu_custom_call.1} parent=1 // pred_check
      _
    $region15: #{tpu_custom_call.1} parent=1 // pred_check_branch
      %41 = sbr.rel (0) target = $region17
    $region16: #{tpu_custom_call.1} parent=1 // pred_region
      %43 = dma.done [#allocation6], 128
    $region17: #{tpu_custom_call.1} parent=1 // pred_fallthru
      _
    %v44 = vld [vmem:[#allocation2] sm:$0xff]
    %v45 = vld [vmem:[#allocation2 + $0x8] sm:$0xff]
    %v46 = vld [vmem:[#allocation5] sm:$0xf]
    %v47 = vld [vmem:[#allocation5 + $0x4] sm:$0xf]
    %v48 = vunpack.c.l.bf16 %v46
    %v49 = vunpack.c.l.bf16 %v47
    %v50 = vsub.f32 2.0, %v44
    %v51 = vsub.f32 2.0, %v45
    %v52 = vmax.f32 %v50, 0.0
    %v53 = vmax.f32 %v51, 0.0
    %v54 = vmul.f32 %v48, %v44
    %v55 = vmul.f32 %v49, %v45
    %v56 = vmul.f32 %v54, %v44
    %v57 = vmul.f32 %v55, %v45
    %v58 = vmul.f32 %v52, %v52
    %v59 = vmul.f32 %v53, %v53
    %v60 = vsub.f32 1.0, %v48
    %v61 = vsub.f32 1.0, %v49
    %v62 = vmul.f32 %v58, %v60
    %v63 = vmul.f32 %v59, %v61
    %v64 = vadd.f32 %v56, %v62
    %v65 = vadd.f32 %v57, %v63
    %v66 = vadd.f32 %v64, %v65
    %67 = vadd.xlane.f32.xlu0 %v66
    %v68 = vpop.xlane.xlu0 %67
    %v69 = vrot.slane %v68, 4
    %v70 = vadd.f32 %v68, %v69
    %v71 = vrot.slane %v70, 2
    %v72 = vadd.f32 %v70, %v71
    %v73 = vrot.slane %v72, 1
    %v74 = vadd.f32 %v72, %v73
    %s75 = vtos %v74
    %s76 = scalar_lea.smem [#allocation7], 0
    %77 = sst [smem:[%s76]] %s75
    // Predicated region
    $region18: #{tpu_custom_call.1} parent=1 // pred_check
      _
    $region19: #{tpu_custom_call.1} parent=1 // pred_check_branch
      %79 = sbr.rel (0) target = $region21
    $region20: #{tpu_custom_call.1} parent=1 // pred_region
      %81 = vsyncadd [#allocation4], 0
      %s83 = sshll.u32 %s2, 4
      %s84 = int_to_ptr.hbm [resolvable:$true] %s83
      %86 = dma.smem_to_hbm [#allocation7], 16, %s84, [#allocation4]
    $region21: #{tpu_custom_call.1} parent=1 // pred_fallthru
      _
    // Predicated region
    $region22: #{tpu_custom_call.1} parent=1 // pred_check
      _
    $region23: #{tpu_custom_call.1} parent=1 // pred_check_branch
      %88 = sbr.rel (0) target = $region25
    $region24: #{tpu_custom_call.1} parent=1 // pred_region
      %90 = dma.done [#allocation4], 16
    $region25: #{tpu_custom_call.1} parent=1 // pred_fallthru
      _
    %91 = sfence
    %92 = vsyncpa [#allocation3], 1
    %93 = vsyncpa [#allocation6], 1
    %94 = vsyncpa [#allocation4], 1

</llo_original>
